<compile_context>
chip_gen: v7x
topology: tpu7x:2x2x1
jax: 0.10.0
libtpu: 0.0.40
codegen_flags: <defaults>
</compile_context>

<pallas_src>
import math
from functools import partial

import numpy as np
import jax
import jax.numpy as jnp
from jax.experimental import pallas as pl
from jax.experimental.pallas import tpu as pltpu


def _round_up(n, m):
    return ((n + m - 1) // m) * m


def _vmem_capacity_bytes(default=128 * 1024 * 1024):
    """Physical VMEM per TensorCore (128 MiB on v5e/v6e, 64 MiB on v7x); used to
    derive per-generation tile sizes / fast-path thresholds."""
    try:
        cap = getattr(pltpu.get_tpu_info(), "vmem_capacity_bytes", None)
        if cap:
            return int(cap)
    except Exception:
        pass
    return default


# ----------------------------- kernel 1: score ------------------------------

def _score_kernel(x_ref, w_ref, o_ref):
    """o[0, :] = tanh(w_hat . x[r, :]) for one (row_tile, C) row tile.

    w_ref is (8, C) (w_hat replicated on 8 sublanes -> natural MXU granularity);
    the contraction is the standard q@k^T MXU form so the result (8, row_tile)
    is already lane-dense; row 0 is stored as a (1, row_tile) block."""
    s = jax.lax.dot_general(
        w_ref[...], x_ref[...],
        dimension_numbers=(((1,), (1,)), ((), ())),       # contract both last dims
        preferred_element_type=jnp.float32)               # f32 accumulate, default precision
    o_ref[...] = jnp.tanh(s[0:1, :])                      # EUP tanh, lane-dense store


def compute_scores(attn, weight, *, row_tile=None):
    """score = tanh((attn * w).sum(-1) / ||w||_2), returned as (N,) float32."""
    N, C = attn.shape
    itemsize = jnp.dtype(attn.dtype).itemsize

    # Fold the 1/||w|| normalization in and pre-cast to the feature dtype once
    # (keeps the kernel free of per-step casts; bf16 inputs stream as bf16).
    w32 = weight.astype(jnp.float32)
    w_hat = (w32 / jnp.linalg.norm(w32)).reshape(1, C)
    w_blk = jnp.broadcast_to(w_hat, (8, C)).astype(attn.dtype)

    if row_tile is None:
        # Target the largest streaming tile that keeps the 2x-buffered input
        # comfortably inside the 32 MiB scoped-VMEM budget on every generation:
        # ~8 MiB tiles on v5e/v6e (128 MiB VMEM), ~4 MiB on v7x (64 MiB VMEM).
        vmem_cap = _vmem_capacity_bytes()
        tile_bytes = max(1 << 20, min(8 << 20, vmem_cap // 16))
        row_tile = tile_bytes // max(1, C * itemsize)
    # Multiple of 128 so the (1, row_tile) output block stays lane-aligned.
    row_tile = max(128, (int(row_tile) // 128) * 128)
    max_rows = max(128, (((12 << 20) // max(1, C * itemsize)) // 128) * 128)
    row_tile = min(row_tile, max_rows)
    if row_tile >= N:
        row_tile = N                                      # single full block (always legal)

    n_blocks = (N + row_tile - 1) // row_tile
    n_pad = n_blocks * row_tile                           # padded tail is sliced off below

    out = pl.pallas_call(
        _score_kernel,
        out_shape=jax.ShapeDtypeStruct((1, n_pad), jnp.float32),
        grid_spec=pltpu.PrefetchScalarGridSpec(
            num_scalar_prefetch=0,
            grid=(n_blocks,),
            in_specs=[pl.BlockSpec((row_tile, C), lambda i: (i, 0)),   # streamed row tiles
                      pl.BlockSpec((8, C), lambda i: (0, 0))],         # resident weight rows
            out_specs=pl.BlockSpec((1, row_tile), lambda i: (0, i)),   # lane-dense scores
        ),
        compiler_params=pltpu.CompilerParams(
            dimension_semantics=("parallel",),            # shard row tiles across TCs on v7x
            vmem_limit_bytes=32 * 1024 * 1024),
    )(attn, w_blk)
    # Columns >= N belong to the padded tail of the last (partial) input block
    # and may contain garbage; they are dropped here.
    return out[0, :N]


# ------------------------ kernel 2: gather + scale --------------------------

def _gather_scale_vmem_kernel(perm_ref, x_ref, s_ref, o_ref, *, block_rows):
    """VMEM fast path: x is resident in VMEM; gather B rows with dynamic row
    reads (no per-row HBM DMAs), then one vectorized lane/sublane-dense scale."""
    i = pl.program_id(0)
    base = i * block_rows
    for r in range(block_rows):                           # static, fully unrolled
        o_ref[pl.ds(r, 1), :] = x_ref[pl.ds(perm_ref[base + r], 1), :]
    o_ref[...] = o_ref[...] * s_ref[...].astype(o_ref.dtype)


def _gather_scale_hbm_kernel(perm_ref, x_hbm, s_ref, o_ref, buf, sem, *, block_rows):
    """HBM path: out block i = x[perm[i*B:(i+1)*B]] * s[i*B:(i+1)*B].

    Every grid step is self-contained (issue all B row DMAs, wait, compute), so
    the grid axis can be marked "parallel" (megacore-sharded on v7x). The slot
    alternation only keeps the landing pad clear of the previous step's reads."""
    i = pl.program_id(0)
    slot = jax.lax.rem(i, 2)
    base = i * block_rows
    B = block_rows

    # Issue all B row DMAs back-to-back (B is static -> fully unrolled so the
    # scalar loop bookkeeping doesn't gate descriptor issue). All copies signal
    # the same per-slot semaphore.
    for r in range(B):
        pltpu.make_async_copy(
            x_hbm.at[pl.ds(perm_ref[base + r], 1)],       # (1, C) data-dependent row
            buf.at[slot, pl.ds(r, 1)],
            sem.at[slot],
        ).start()

    # Wait for all of them: B equal-sized waits against the shared per-slot
    # semaphore. The placeholder source ref has the same (1, C) shape as every
    # issued copy, so each wait retires exactly one row's worth of the signal.
    for r in range(B):
        pltpu.make_async_copy(
            x_hbm.at[pl.ds(0, 1)],
            buf.at[slot, pl.ds(r, 1)],
            sem.at[slot],
        ).wait()

    rows = buf[slot]                                      # (B, C), native feature dtype
    o_ref[...] = rows * s_ref[...].astype(rows.dtype)     # lane/sublane-dense store


def gather_and_scale(x, score, perm, multiplier, *, block_rows=None, force_hbm=False):
    """out[i, :] = multiplier * x[perm[i], :] * score[perm[i]]  -> (k, C)."""
    N, C = x.shape
    k = int(perm.shape[0])
    itemsize = jnp.dtype(x.dtype).itemsize
    vmem_cap = _vmem_capacity_bytes()

    if block_rows is None:
        block_rows = 256                                  # 256-1024 reasonable; 256 keeps unroll small
    B = max(8, min(int(block_rows), _round_up(k, 8)))
    B = (B // 8) * 8
    k_pad = _round_up(k, B)
    pad = k_pad - k

    # perm is padded with 0 so the fixed B-row loop never reads OOB indices.
    # The padded rows land in the masked tail of the final (partial) output
    # block and their scores are padded with 0, so they are harmless either way.
    perm_p = jnp.pad(perm.astype(jnp.int32), (0, pad))
    # Pre-gather score[perm] and fold the multiplier in (no per-row score DMAs,
    # works for traced multipliers too).
    s = score[perm].astype(jnp.float32) * jnp.float32(multiplier)
    s = jnp.pad(s, (0, pad)).reshape(k_pad, 1)

    n_blocks = k_pad // B
    out_shape = jax.ShapeDtypeStruct((k, C), x.dtype)
    x_bytes = N * C * itemsize

    # --- VMEM fast path: x fits comfortably on chip (threshold per generation:
    #     ~16 MiB on v7x, ~32 MiB on v5e/v6e). -------------------------------
    if (not force_hbm) and x_bytes <= vmem_cap // 4:
        limit = min(vmem_cap * 3 // 4, max(32 << 20, x_bytes + (8 << 20)))
        fast_call = pl.pallas_call(
            partial(_gather_scale_vmem_kernel, block_rows=B),
            out_shape=out_shape,
            grid_spec=pltpu.PrefetchScalarGridSpec(
                num_scalar_prefetch=1,                    # perm lives in SMEM
                grid=(n_blocks,),
                in_specs=[
                    pl.BlockSpec((N, C), lambda i, perm: (0, 0)),      # x resident in VMEM
                    pl.BlockSpec((B, 1), lambda i, perm: (i, 0)),      # score*multiplier
                ],
                out_specs=pl.BlockSpec((B, C), lambda i, perm: (i, 0)),
            ),
            compiler_params=pltpu.CompilerParams(
                dimension_semantics=("parallel",),
                vmem_limit_bytes=limit),
        )
        try:
            return fast_call(perm_p, x, s)
        except Exception:
            # TODO(synk): conservative fallback if in-VMEM dynamic row reads are
            # rejected by the compiler on some generation; the HBM-DMA path below
            # computes the same result.
            pass

    # --- General path: x stays in HBM, per-row DMAs into a VMEM landing pad. --
    limit = min(vmem_cap * 3 // 4, max(32 << 20, 4 * B * C * itemsize + (4 << 20)))
    return pl.pallas_call(
        partial(_gather_scale_hbm_kernel, block_rows=B),
        out_shape=out_shape,
        grid_spec=pltpu.PrefetchScalarGridSpec(
            num_scalar_prefetch=1,                        # perm lives in SMEM
            grid=(n_blocks,),
            in_specs=[
                pl.BlockSpec(memory_space=pl.ANY),        # x stays in HBM; manual row DMAs
                pl.BlockSpec((B, 1), lambda i, perm: (i, 0)),
            ],
            out_specs=pl.BlockSpec((B, C), lambda i, perm: (i, 0)),
            scratch_shapes=[
                pltpu.VMEM((2, B, C), x.dtype),           # gather landing pad (slot = i % 2)
                pltpu.SemaphoreType.DMA((2,)),            # ONE shared semaphore per slot
            ],
        ),
        compiler_params=pltpu.CompilerParams(
            # Steps are self-contained -> safe to megacore-shard on v7x.
            dimension_semantics=("parallel",),
            vmem_limit_bytes=limit),
    )(perm_p, x, s)


# --------------------------- edge filtering glue -----------------------------

def filter_adj(edge_index, edge_attr, perm, num_nodes):
    """Relabeling + keep-mask on device; only the variable-length compaction is
    done on host (the output size is data-dependent, as in PyG)."""
    k = perm.shape[0]
    new_idx = jnp.full((num_nodes,), -1, dtype=jnp.int32)
    new_idx = new_idx.at[perm].set(jnp.arange(k, dtype=jnp.int32))
    row = new_idx[edge_index[0]]
    col = new_idx[edge_index[1]]
    keep = (row >= 0) & (col >= 0)
    # TODO(synk): variable-length output forces a device->host sync here (and is
    # not jax.jit-able); a fixed-size padded/masked edge list would keep this
    # fully on-device.
    keep_np = np.asarray(keep)
    ei = np.stack([np.asarray(row)[keep_np], np.asarray(col)[keep_np]], axis=0).astype(np.int32)
    ea = None if edge_attr is None else np.asarray(edge_attr)[keep_np]
    return ei, ea


# ----------------------------- module wrapper --------------------------------

class TopKPoolingPallas:
    def __init__(self, in_channels, ratio=0.5, min_score=None, multiplier=1, *, key):
        self.in_channels = in_channels
        self.ratio = ratio
        self.min_score = min_score
        self.multiplier = multiplier
        # PyG `uniform(size, tensor)` init: U(-1/sqrt(size), 1/sqrt(size))
        bound = 1.0 / math.sqrt(in_channels)
        self.weight = jax.random.uniform(
            key, (1, in_channels), dtype=jnp.float32, minval=-bound, maxval=bound)

    def __call__(self, x, edge_index, edge_attr=None, batch=None, attn=None,
                 *, row_tile=None, gather_block_rows=None):
        N = x.shape[0]
        if batch is None:
            batch = jnp.zeros((N,), dtype=jnp.int32)
        attn = x if attn is None else attn
        if attn.ndim == 1:
            attn = attn[:, None]

        # TODO(synk): min_score branch (batch-segmented softmax) and per-graph
        # (batched) top-k are not implemented; only the default single-graph,
        # min_score=None path is supported.
        score = compute_scores(attn, self.weight, row_tile=row_tile)     # (N,) f32

        k = int(math.ceil(self.ratio * N))
        _, perm = jax.lax.top_k(score, k)
        perm = perm.astype(jnp.int32)

        x_out = gather_and_scale(x, score, perm, self.multiplier,
                                 block_rows=gather_block_rows)           # (k, C)

        batch_out = batch[perm]
        score_perm = score[perm]

        edge_index_out, edge_attr_out = filter_adj(edge_index, edge_attr, perm, N)
        return (x_out, edge_index_out, edge_attr_out, batch_out, perm, score_perm)


# ----------------------------------- main -------------------------------------

if __name__ == "__main__":
    key = jax.random.PRNGKey(0)
    k_w, k_x, k_e = jax.random.split(key, 3)

    # N chosen so explicit small tiles exercise multi-block grids + partial blocks.
    N, C, E = 600, 128, 256
    x = jax.random.normal(k_x, (N, C), dtype=jnp.float32)
    edge_index = jax.random.randint(k_e, (2, E), 0, N, dtype=jnp.int32)

    pool = TopKPoolingPallas(in_channels=C, ratio=0.5, multiplier=1, key=k_w)

    # (a) default tiling: large score tile (single block here), B=256 gather blocks,
    #     VMEM fast path for the gather (x is tiny).
    out_a = pool(x, edge_index)
    jax.block_until_ready((out_a[0], out_a[3], out_a[4], out_a[5]))

    # (b) small tiles: multi-block score grid (partial last block) + multi-block gather.
    x_out, ei_out, ea_out, batch_out, perm, score_perm = pool(
        x, edge_index, row_tile=256, gather_block_rows=64)
    jax.block_until_ready((x_out, batch_out, perm, score_perm))

    # ---- cross-check against a plain JAX reference of the same math ----
    w = pool.weight
    score_ref = jnp.tanh((x * w).sum(-1) / jnp.linalg.norm(w))
    k = int(math.ceil(0.5 * N))
    topk_vals_ref = jax.lax.top_k(score_ref, k)[0]

    perm_np = np.asarray(perm)
    score_perm_np = np.asarray(score_perm)
    # Score kernel matches the reference math per selected node (default MXU
    # precision -> slightly looser tolerance than bit-exact).
    assert np.allclose(score_perm_np, np.asarray(score_ref)[perm_np], atol=5e-3, rtol=5e-3)
    # Top-k selection picks (numerically) the same set of scores.
    assert np.allclose(np.sort(score_perm_np), np.sort(np.asarray(topk_vals_ref)),
                       atol=5e-3, rtol=5e-3)
    # Gather/scale kernel is exact w.r.t. the returned perm/score.
    x_expect = np.asarray(x)[perm_np] * score_perm_np[:, None]
    assert np.allclose(np.asarray(x_out), x_expect, atol=1e-6, rtol=1e-6)
    # Default-config call is self-consistent w.r.t. its own perm/score as well.
    perm_a = np.asarray(out_a[4]); sp_a = np.asarray(out_a[5])
    assert np.allclose(np.asarray(out_a[0]), np.asarray(x)[perm_a] * sp_a[:, None],
                       atol=1e-6, rtol=1e-6)
    # Edges only reference kept nodes and are relabeled into [0, k).
    if ei_out.size:
        assert ei_out.min() >= 0 and ei_out.max() < k
    assert np.array_equal(np.asarray(batch_out), np.zeros(k, dtype=np.int32))

    # Explicitly exercise the HBM per-row-DMA gather path (the large-x path).
    score_full = compute_scores(x, pool.weight, row_tile=256)
    x_hbm = gather_and_scale(x, score_full, perm, 1.0, block_rows=64, force_hbm=True)
    jax.block_until_ready(x_hbm)
    x_hbm_expect = np.asarray(x)[perm_np] * np.asarray(score_full)[perm_np][:, None]
    assert np.allclose(np.asarray(x_hbm), x_hbm_expect, atol=1e-6, rtol=1e-6)

    # multiplier != 1 path (folded into the pre-gathered score vector).
    pool2 = TopKPoolingPallas(in_channels=C, ratio=0.5, multiplier=2.0, key=k_w)
    x_out2 = pool2(x, edge_index, row_tile=256, gather_block_rows=64)[0]
    jax.block_until_ready(x_out2)
    assert np.allclose(np.asarray(x_out2), 2.0 * x_expect, atol=1e-5, rtol=1e-5)

    print("KERNEL_OK")
</pallas_src>

<mosaic_0001>
module attributes {stable_mosaic.version = 11 : i64} {
  func.func @_score_kernel(%arg0: i32, %arg1: memref<600x128xf32, #tpu.memory_space<vmem>>, %arg2: memref<8x128xf32, #tpu.memory_space<vmem>>, %arg3: memref<1x600xf32, #tpu.memory_space<vmem>>) attributes {dimension_semantics = [#tpu.dimension_semantics<parallel>], iteration_bounds = array<i64: 1>, scalar_prefetch = 0 : i64, scratch_operands = 0 : i64, tpu.core_type = #tpu.core_type<tc>, window_params = [{transform_indices = @transform_0, window_bounds = array<i64: 600, 128>}, {pipeline_mode = #tpu.pipeline_mode<synchronous>, transform_indices = @transform_1, window_bounds = array<i64: 8, 128>}, {transform_indices = @transform_2, window_bounds = array<i64: 1, 600>}]} {
    %c0 = arith.constant 0 : index
    %c0_0 = arith.constant 0 : index
    %0 = vector.load %arg2[%c0, %c0_0] : memref<8x128xf32, #tpu.memory_space<vmem>>, vector<8x128xf32>
    %c0_1 = arith.constant 0 : index
    %c0_2 = arith.constant 0 : index
    %1 = vector.load %arg1[%c0_1, %c0_2] : memref<600x128xf32, #tpu.memory_space<vmem>>, vector<600x128xf32>
    %cst = arith.constant dense<0.000000e+00> : vector<8x600xf32>
    %2 = tpu.matmul %0, %1, %cst {dimension_numbers = #tpu.dot_dimension_numbers<[1], [1], [0], [0], [0, 0, 1, 0], [], []>} : vector<8x128xf32>, vector<600x128xf32>, vector<8x600xf32> -> vector<8x600xf32>
    %3 = vector.extract_strided_slice %2 {offsets = [0, 0], sizes = [1, 600], strides = [1, 1]} : vector<8x600xf32> to vector<1x600xf32>
    %4 = math.tanh %3 : vector<1x600xf32>
    %c0_3 = arith.constant 0 : index
    %c0_4 = arith.constant 0 : index
    %5 = vector.load %arg3[%c0_3, %c0_4] : memref<1x600xf32, #tpu.memory_space<vmem>>, vector<1x600xf32>
    tpu.vector_store %arg3[%c0_3, %c0_4], %4 {strides = array<i32>} : memref<1x600xf32, #tpu.memory_space<vmem>>, vector<1x600xf32>,
    return
  }
  func.func @transform_0(%arg0: i32) -> (i32, i32) {
    %c0_i32 = arith.constant 0 : i32
    %c0_i32_0 = arith.constant 0 : i32
    return %arg0, %c0_i32 : i32, i32
  }
  func.func @transform_1(%arg0: i32) -> (i32, i32) {
    %c0_i32 = arith.constant 0 : i32
    %c0_i32_0 = arith.constant 0 : i32
    %c0_i32_1 = arith.constant 0 : i32
    return %c0_i32, %c0_i32_0 : i32, i32
  }
  func.func @transform_2(%arg0: i32) -> (i32, i32) {
    %c0_i32 = arith.constant 0 : i32
    %c0_i32_0 = arith.constant 0 : i32
    return %c0_i32, %arg0 : i32, i32
  }
}

</mosaic_0001>

<llo_original>
// kernel: tpu_custom_call.1
$region0: #{tpu_custom_call.1}
  #allocation0 [shape = 'u32[]', space=smem, size = 0x4, offset = 0x4, fixed_abs, tag = 'smem constant byte address 0x4 - core index']
  #allocation1 [shape = 'u32[144,128]{1,0:T(1,128)}', space=vmem, size = 0x12000, scoped, tag = 'internal scratch']
  %s0 = inlined_call_operand.hbm [shape: f32[600,128], index: 0, kind: input, shape index: {}]
  %s1 = inlined_call_operand.hbm [shape: f32[8,128], index: 1, kind: input, shape index: {}]
  %s2 = inlined_call_operand.hbm [shape: f32[1,600], index: 2, kind: output, shape index: {}]
  %s3 = sld [smem:[#allocation0]]
  $region26: #{tpu_custom_call.1} parent=0
    _
  %s5 = ssub.s32 1, %s3
  %s6 = scalar_select 0, %s5, %s3
  $region1: #{tpu_custom_call.1} parent=0
    #allocation2 [shape = 'u8[307200]{0}', space=vmem, size = 0x4b000, scoped, tag = 'input window, operand 0, single buffered']
    #allocation3 [shape = 's32[1]{0}', space=sflag, size = 0x4, scoped, tag = 'scoped memory for tpu_custom_call.1']
    #allocation4 [shape = 's32[1]{0}', space=sflag, size = 0x4, scoped, tag = 'scoped memory for tpu_custom_call.1']
    #allocation5 [shape = 'u8[4096]{0}', space=vmem, size = 0x1000, scoped, tag = 'input window, operand 1, single buffered']
    #allocation6 [shape = 's32[1]{0}', space=sflag, size = 0x4, scoped, tag = 'scoped memory for tpu_custom_call.1']
    #allocation7 [shape = 'u8[2560]{0}', space=vmem, size = 0xc00, scoped, tag = 'output window, operand 0, single buffered']
    %7 = vsyncpa [#allocation3], 0
    %8 = vsyncpa [#allocation6], 0
    %9 = vsyncpa [#allocation4], 0
    // Predicated region
    $region2: #{tpu_custom_call.1} parent=1 // pred_check
      _
    $region3: #{tpu_custom_call.1} parent=1 // pred_check_branch
      %11 = sbr.rel (0) target = $region5
    $region4: #{tpu_custom_call.1} parent=1 // pred_region
      %s13 = ssub.s32 9600, 9600
      %14 = vsyncadd [#allocation3], %s13
      %s15 = sshll.u32 [#allocation2], 4
      %s16 = int_to_ptr.vmem [resolvable:$true] %s15
      %21 = dma.hbm_to_vmem [thread:$0]  %s0, 9600, %s16, [#allocation3], 128, 128, 8
    $region5: #{tpu_custom_call.1} parent=1 // pred_fallthru
      _
    // Predicated region
    $region6: #{tpu_custom_call.1} parent=1 // pred_check
      _
    $region7: #{tpu_custom_call.1} parent=1 // pred_check_branch
      %23 = sbr.rel (0) target = $region9
    $region8: #{tpu_custom_call.1} parent=1 // pred_region
      %s25 = ssub.s32 128, 128
      %26 = vsyncadd [#allocation6], %s25
      %s28 = sshll.u32 [#allocation5], 4
      %s29 = int_to_ptr.vmem [resolvable:$true] %s28
      %31 = dma.hbm_to_vmem [thread:$0]  %s1, 128, %s29, [#allocation6]
    $region9: #{tpu_custom_call.1} parent=1 // pred_fallthru
      _
    // Predicated region
    $region10: #{tpu_custom_call.1} parent=1 // pred_check
      _
    $region11: #{tpu_custom_call.1} parent=1 // pred_check_branch
      %33 = sbr.rel (0) target = $region13
    $region12: #{tpu_custom_call.1} parent=1 // pred_region
      %34 = dma.done [#allocation3], 9600
    $region13: #{tpu_custom_call.1} parent=1 // pred_fallthru
      _
    // Predicated region
    $region14: #{tpu_custom_call.1} parent=1 // pred_check
      _
    $region15: #{tpu_custom_call.1} parent=1 // pred_check_branch
      %36 = sbr.rel (0) target = $region17
    $region16: #{tpu_custom_call.1} parent=1 // pred_region
      %37 = dma.done [#allocation6], 128
    $region17: #{tpu_custom_call.1} parent=1 // pred_fallthru
      _
    %v38 = vld [vmem:[#allocation5] sm:$0xff]
    %v39 = vld [vmem:[#allocation2] sm:$0xff]
    %v40 = vld [vmem:[#allocation2 + $0x8] sm:$0xff]
    %v41 = vld [vmem:[#allocation2 + $0x10] sm:$0xff]
    %v42 = vld [vmem:[#allocation2 + $0x18] sm:$0xff]
    %v43 = vld [vmem:[#allocation2 + $0x20] sm:$0xff]
    %v44 = vld [vmem:[#allocation2 + $0x28] sm:$0xff]
    %v45 = vld [vmem:[#allocation2 + $0x30] sm:$0xff]
    %v46 = vld [vmem:[#allocation2 + $0x38] sm:$0xff]
    %v47 = vld [vmem:[#allocation2 + $0x40] sm:$0xff]
    %v48 = vld [vmem:[#allocation2 + $0x48] sm:$0xff]
    %v49 = vld [vmem:[#allocation2 + $0x50] sm:$0xff]
    %v50 = vld [vmem:[#allocation2 + $0x58] sm:$0xff]
    %v51 = vld [vmem:[#allocation2 + $0x60] sm:$0xff]
    %v52 = vld [vmem:[#allocation2 + $0x68] sm:$0xff]
    %v53 = vld [vmem:[#allocation2 + $0x70] sm:$0xff]
    %v54 = vld [vmem:[#allocation2 + $0x78] sm:$0xff]
    %v55 = vld [vmem:[#allocation2 + $0x80] sm:$0xff]
    %v56 = vld [vmem:[#allocation2 + $0x88] sm:$0xff]
    %v57 = vld [vmem:[#allocation2 + $0x90] sm:$0xff]
    %v58 = vld [vmem:[#allocation2 + $0x98] sm:$0xff]
    %v59 = vld [vmem:[#allocation2 + $0xa0] sm:$0xff]
    %v60 = vld [vmem:[#allocation2 + $0xa8] sm:$0xff]
    %v61 = vld [vmem:[#allocation2 + $0xb0] sm:$0xff]
    %v62 = vld [vmem:[#allocation2 + $0xb8] sm:$0xff]
    %v63 = vld [vmem:[#allocation2 + $0xc0] sm:$0xff]
    %v64 = vld [vmem:[#allocation2 + $0xc8] sm:$0xff]
    %v65 = vld [vmem:[#allocation2 + $0xd0] sm:$0xff]
    %v66 = vld [vmem:[#allocation2 + $0xd8] sm:$0xff]
    %v67 = vld [vmem:[#allocation2 + $0xe0] sm:$0xff]
    %v68 = vld [vmem:[#allocation2 + $0xe8] sm:$0xff]
    %v69 = vld [vmem:[#allocation2 + $0xf0] sm:$0xff]
    %v70 = vld [vmem:[#allocation2 + $0xf8] sm:$0xff]
    %v71 = vld [vmem:[#allocation2 + $0x100] sm:$0xff]
    %v72 = vld [vmem:[#allocation2 + $0x108] sm:$0xff]
    %v73 = vld [vmem:[#allocation2 + $0x110] sm:$0xff]
    %v74 = vld [vmem:[#allocation2 + $0x118] sm:$0xff]
    %v75 = vld [vmem:[#allocation2 + $0x120] sm:$0xff]
    %v76 = vld [vmem:[#allocation2 + $0x128] sm:$0xff]
    %v77 = vld [vmem:[#allocation2 + $0x130] sm:$0xff]
    %v78 = vld [vmem:[#allocation2 + $0x138] sm:$0xff]
    %v79 = vld [vmem:[#allocation2 + $0x140] sm:$0xff]
    %v80 = vld [vmem:[#allocation2 + $0x148] sm:$0xff]
    %v81 = vld [vmem:[#allocation2 + $0x150] sm:$0xff]
    %v82 = vld [vmem:[#allocation2 + $0x158] sm:$0xff]
    %v83 = vld [vmem:[#allocation2 + $0x160] sm:$0xff]
    %v84 = vld [vmem:[#allocation2 + $0x168] sm:$0xff]
    %v85 = vld [vmem:[#allocation2 + $0x170] sm:$0xff]
    %v86 = vld [vmem:[#allocation2 + $0x178] sm:$0xff]
    %v87 = vld [vmem:[#allocation2 + $0x180] sm:$0xff]
    %v88 = vld [vmem:[#allocation2 + $0x188] sm:$0xff]
    %v89 = vld [vmem:[#allocation2 + $0x190] sm:$0xff]
    %v90 = vld [vmem:[#allocation2 + $0x198] sm:$0xff]
    %v91 = vld [vmem:[#allocation2 + $0x1a0] sm:$0xff]
    %v92 = vld [vmem:[#allocation2 + $0x1a8] sm:$0xff]
    %v93 = vld [vmem:[#allocation2 + $0x1b0] sm:$0xff]
    %v94 = vld [vmem:[#allocation2 + $0x1b8] sm:$0xff]
    %v95 = vld [vmem:[#allocation2 + $0x1c0] sm:$0xff]
    %v96 = vld [vmem:[#allocation2 + $0x1c8] sm:$0xff]
    %v97 = vld [vmem:[#allocation2 + $0x1d0] sm:$0xff]
    %v98 = vld [vmem:[#allocation2 + $0x1d8] sm:$0xff]
    %v99 = vld [vmem:[#allocation2 + $0x1e0] sm:$0xff]
    %v100 = vld [vmem:[#allocation2 + $0x1e8] sm:$0xff]
    %v101 = vld [vmem:[#allocation2 + $0x1f0] sm:$0xff]
    %v102 = vld [vmem:[#allocation2 + $0x1f8] sm:$0xff]
    %v103 = vld [vmem:[#allocation2 + $0x200] sm:$0xff]
    %v104 = vld [vmem:[#allocation2 + $0x208] sm:$0xff]
    %v105 = vld [vmem:[#allocation2 + $0x210] sm:$0xff]
    %v106 = vld [vmem:[#allocation2 + $0x218] sm:$0xff]
    %v107 = vld [vmem:[#allocation2 + $0x220] sm:$0xff]
    %v108 = vld [vmem:[#allocation2 + $0x228] sm:$0xff]
    %v109 = vld [vmem:[#allocation2 + $0x230] sm:$0xff]
    %v110 = vld [vmem:[#allocation2 + $0x238] sm:$0xff]
    %v111 = vld [vmem:[#allocation2 + $0x240] sm:$0xff]
    %v112 = vld [vmem:[#allocation2 + $0x248] sm:$0xff]
    %v113 = vld [vmem:[#allocation2 + $0x250] sm:$0xff]
    %114 = vmatprep.subr.mxu0 0.0
    %115 = vmatpush1.xpose.msra.mxu0 %v39
    %116 = vmatprep.subr.mxu0 0.0
    %117 = vmatpush1.xpose.msra.mxu0 %v40
    %118 = vmatprep.subr.mxu0 0.0
    %119 = vmatpush1.xpose.msra.mxu0 %v41
    %120 = vmatprep.subr.mxu0 0.0
    %121 = vmatpush1.xpose.msra.mxu0 %v42
    %122 = vmatprep.subr.mxu0 0.0
    %123 = vmatpush1.xpose.msra.mxu0 %v43
    %124 = vmatprep.subr.mxu0 0.0
    %125 = vmatpush1.xpose.msra.mxu0 %v44
    %126 = vmatprep.subr.mxu0 0.0
    %127 = vmatpush1.xpose.msra.mxu0 %v45
    %128 = vmatprep.subr.mxu0 0.0
    %129 = vmatpush1.xpose.msra.mxu0 %v46
    %130 = vmatprep.subr.mxu0 0.0
    %131 = vmatpush1.xpose.msra.mxu0 %v47
    %132 = vmatprep.subr.mxu0 0.0
    %133 = vmatpush1.xpose.msra.mxu0 %v48
    %134 = vmatprep.subr.mxu0 0.0
    %135 = vmatpush1.xpose.msra.mxu0 %v49
    %136 = vmatprep.subr.mxu0 0.0
    %137 = vmatpush1.xpose.msra.mxu0 %v50
    %138 = vmatprep.subr.mxu0 0.0
    %139 = vmatpush1.xpose.msra.mxu0 %v51
    %140 = vmatprep.subr.mxu0 0.0
    %141 = vmatpush1.xpose.msra.mxu0 %v52
    %142 = vmatprep.subr.mxu0 0.0
    %143 = vmatpush1.xpose.msra.mxu0 %v53
    %144 = vmatprep.subr.mxu0 0.0
    %145 = vmatpush1.xpose.msra.mxu0 %v54
    %146 = vmatprep.subr.mxu0 0.0
    %147 = vmatpush1.xpose.msra.mxu0 %v55
    %148 = vmatprep.subr.mxu0 0.0
    %149 = vmatpush1.xpose.msra.mxu0 %v56
    %150 = vmatprep.subr.mxu0 0.0
    %151 = vmatpush1.xpose.msra.mxu0 %v57
    %152 = vmatprep.subr.mxu0 0.0
    %153 = vmatpush1.xpose.msra.mxu0 %v58
    %154 = vmatprep.subr.mxu0 0.0
    %155 = vmatpush1.xpose.msra.mxu0 %v59
    %156 = vmatprep.subr.mxu0 0.0
    %157 = vmatpush1.xpose.msra.mxu0 %v60
    %158 = vmatprep.subr.mxu0 0.0
    %159 = vmatpush1.xpose.msra.mxu0 %v61
    %160 = vmatprep.subr.mxu0 0.0
    %161 = vmatpush1.xpose.msra.mxu0 %v62
    %162 = vmatprep.subr.mxu0 0.0
    %163 = vmatpush1.xpose.msra.mxu0 %v63
    %164 = vmatprep.subr.mxu0 0.0
    %165 = vmatpush1.xpose.msra.mxu0 %v64
    %166 = vmatprep.subr.mxu0 0.0
    %167 = vmatpush1.xpose.msra.mxu0 %v65
    %168 = vmatprep.subr.mxu0 0.0
    %169 = vmatpush1.xpose.msra.mxu0 %v66
    %170 = vmatprep.subr.mxu0 0.0
    %171 = vmatpush1.xpose.msra.mxu0 %v67
    %172 = vmatprep.subr.mxu0 0.0
    %173 = vmatpush1.xpose.msra.mxu0 %v68
    %174 = vmatprep.subr.mxu0 0.0
    %175 = vmatpush1.xpose.msra.mxu0 %v69
    %176 = vmatprep.subr.mxu0 0.0
    %177 = vmatpush1.xpose.msra.mxu0 %v70
    %178 = vmatprep.mubr.f32.mxu0 0.0
    %179 = vmatmul.mubr.f32.gmra.mrb[0].mxu0 %v38
    %v180 = vpop.f32.mrb[0].mxu0
    %v181 = vadd.f32 0.0, %v180
    %v182 = vpop.f32.mrb[0].mxu0
    %v183 = vadd.f32 0.0, %v182
    %184 = vdwg.mxu0
    %185 = vmatprep.subr.mxu0 0.0
    %186 = vmatpush1.xpose.msra.mxu0 %v71
    %187 = vmatprep.subr.mxu0 0.0
    %188 = vmatpush1.xpose.msra.mxu0 %v72
    %189 = vmatprep.subr.mxu0 0.0
    %190 = vmatpush1.xpose.msra.mxu0 %v73
    %191 = vmatprep.subr.mxu0 0.0
    %192 = vmatpush1.xpose.msra.mxu0 %v74
    %193 = vmatprep.subr.mxu0 0.0
    %194 = vmatpush1.xpose.msra.mxu0 %v75
    %195 = vmatprep.subr.mxu0 0.0
    %196 = vmatpush1.xpose.msra.mxu0 %v76
    %197 = vmatprep.subr.mxu0 0.0
    %198 = vmatpush1.xpose.msra.mxu0 %v77
    %199 = vmatprep.subr.mxu0 0.0
    %200 = vmatpush1.xpose.msra.mxu0 %v78
    %201 = vmatprep.subr.mxu0 0.0
    %202 = vmatpush1.xpose.msra.mxu0 %v79
    %203 = vmatprep.subr.mxu0 0.0
    %204 = vmatpush1.xpose.msra.mxu0 %v80
    %205 = vmatprep.subr.mxu0 0.0
    %206 = vmatpush1.xpose.msra.mxu0 %v81
    %207 = vmatprep.subr.mxu0 0.0
    %208 = vmatpush1.xpose.msra.mxu0 %v82
    %209 = vmatprep.subr.mxu0 0.0
    %210 = vmatpush1.xpose.msra.mxu0 %v83
    %211 = vmatprep.subr.mxu0 0.0
    %212 = vmatpush1.xpose.msra.mxu0 %v84
    %213 = vmatprep.subr.mxu0 0.0
    %214 = vmatpush1.xpose.msra.mxu0 %v85
    %215 = vmatprep.subr.mxu0 0.0
    %216 = vmatpush1.xpose.msra.mxu0 %v86
    %217 = vmatprep.subr.mxu0 0.0
    %218 = vmatpush1.xpose.msra.mxu0 %v87
    %219 = vmatprep.subr.mxu0 0.0
    %220 = vmatpush1.xpose.msra.mxu0 %v88
    %221 = vmatprep.subr.mxu0 0.0
    %222 = vmatpush1.xpose.msra.mxu0 %v89
    %223 = vmatprep.subr.mxu0 0.0
    %224 = vmatpush1.xpose.msra.mxu0 %v90
    %225 = vmatprep.subr.mxu0 0.0
    %226 = vmatpush1.xpose.msra.mxu0 %v91
    %227 = vmatprep.subr.mxu0 0.0
    %228 = vmatpush1.xpose.msra.mxu0 %v92
    %229 = vmatprep.subr.mxu0 0.0
    %230 = vmatpush1.xpose.msra.mxu0 %v93
    %231 = vmatprep.subr.mxu0 0.0
    %232 = vmatpush1.xpose.msra.mxu0 %v94
    %233 = vmatprep.subr.mxu0 0.0
    %234 = vmatpush1.xpose.msra.mxu0 %v95
    %235 = vmatprep.subr.mxu0 0.0
    %236 = vmatpush1.xpose.msra.mxu0 %v96
    %237 = vmatprep.subr.mxu0 0.0
    %238 = vmatpush1.xpose.msra.mxu0 %v97
    %239 = vmatprep.subr.mxu0 0.0
    %240 = vmatpush1.xpose.msra.mxu0 %v98
    %241 = vmatprep.subr.mxu0 0.0
    %242 = vmatpush1.xpose.msra.mxu0 %v99
    %243 = vmatprep.subr.mxu0 0.0
    %244 = vmatpush1.xpose.msra.mxu0 %v100
    %245 = vmatprep.subr.mxu0 0.0
    %246 = vmatpush1.xpose.msra.mxu0 %v101
    %247 = vmatprep.subr.mxu0 0.0
    %248 = vmatpush1.xpose.msra.mxu0 %v102
    %249 = vmatprep.mubr.f32.mxu0 0.0
    %250 = vmatmul.mubr.f32.gmra.mrb[0].mxu0 %v38
    %v251 = vpop.f32.mrb[0].mxu0
    %v252 = vadd.f32 0.0, %v251
    %v253 = vpop.f32.mrb[0].mxu0
    %v254 = vadd.f32 0.0, %v253
    %255 = vdwg.mxu0
    %256 = vmatprep.subr.mxu0 0.0
    %257 = vmatpush1.xpose.msra.mxu0 %v103
    %258 = vmatprep.subr.mxu0 0.0
    %259 = vmatpush1.xpose.msra.mxu0 %v104
    %260 = vmatprep.subr.mxu0 0.0
    %261 = vmatpush1.xpose.msra.mxu0 %v105
    %262 = vmatprep.subr.mxu0 0.0
    %263 = vmatpush1.xpose.msra.mxu0 %v106
    %264 = vmatprep.subr.mxu0 0.0
    %265 = vmatpush1.xpose.msra.mxu0 %v107
    %266 = vmatprep.subr.mxu0 0.0
    %267 = vmatpush1.xpose.msra.mxu0 %v108
    %268 = vmatprep.subr.mxu0 0.0
    %269 = vmatpush1.xpose.msra.mxu0 %v109
    %270 = vmatprep.subr.mxu0 0.0
    %271 = vmatpush1.xpose.msra.mxu0 %v110
    %272 = vmatprep.subr.mxu0 0.0
    %273 = vmatpush1.xpose.msra.mxu0 %v111
    %274 = vmatprep.subr.mxu0 0.0
    %275 = vmatpush1.xpose.msra.mxu0 %v112
    %276 = vmatprep.subr.mxu0 0.0
    %277 = vmatpush1.xpose.msra.mxu0 %v113
    %278 = vmatprep.subr.mxu0 0.0
    %279 = vmatpush1.xpose.msra.mxu0 0.0
    %280 = vmatprep.subr.mxu0 0.0
    %281 = vmatpush1.xpose.msra.mxu0 0.0
    %282 = vmatprep.subr.mxu0 0.0
    %283 = vmatpush1.xpose.msra.mxu0 0.0
    %284 = vmatprep.subr.mxu0 0.0
    %285 = vmatpush1.xpose.msra.mxu0 0.0
    %286 = vmatprep.subr.mxu0 0.0
    %287 = vmatpush1.xpose.msra.mxu0 0.0
    %288 = vmatprep.subr.mxu0 0.0
    %289 = vmatpush1.xpose.msra.mxu0 0.0
    %290 = vmatprep.subr.mxu0 0.0
    %291 = vmatpush1.xpose.msra.mxu0 0.0
    %292 = vmatprep.subr.mxu0 0.0
    %293 = vmatpush1.xpose.msra.mxu0 0.0
    %294 = vmatprep.subr.mxu0 0.0
    %295 = vmatpush1.xpose.msra.mxu0 0.0
    %296 = vmatprep.subr.mxu0 0.0
    %297 = vmatpush1.xpose.msra.mxu0 0.0
    %298 = vmatprep.subr.mxu0 0.0
    %299 = vmatpush1.xpose.msra.mxu0 0.0
    %300 = vmatprep.subr.mxu0 0.0
    %301 = vmatpush1.xpose.msra.mxu0 0.0
    %302 = vmatprep.subr.mxu0 0.0
    %303 = vmatpush1.xpose.msra.mxu0 0.0
    %304 = vmatprep.subr.mxu0 0.0
    %305 = vmatpush1.xpose.msra.mxu0 0.0
    %306 = vmatprep.subr.mxu0 0.0
    %307 = vmatpush1.xpose.msra.mxu0 0.0
    %308 = vmatprep.subr.mxu0 0.0
    %309 = vmatpush1.xpose.msra.mxu0 0.0
    %310 = vmatprep.subr.mxu0 0.0
    %311 = vmatpush1.xpose.msra.mxu0 0.0
    %312 = vmatprep.subr.mxu0 0.0
    %313 = vmatpush1.xpose.msra.mxu0 0.0
    %314 = vmatprep.subr.mxu0 0.0
    %315 = vmatpush1.xpose.msra.mxu0 0.0
    %316 = vmatprep.subr.mxu0 0.0
    %317 = vmatpush1.xpose.msra.mxu0 0.0
    %318 = vmatprep.subr.mxu0 0.0
    %319 = vmatpush1.xpose.msra.mxu0 0.0
    %320 = vmatprep.mubr.f32.mxu0 0.0
    %321 = vmatmul.mubr.f32.gmra.mrb[0].mxu0 %v38
    %v322 = vpop.f32.mrb[0].mxu0
    %v323 = vadd.f32 0.0, %v322
    %v324 = vpop.f32.mrb[0].mxu0
    %325 = vdwg.mxu0
    %v326 = vtanh.pop %v181
    %v327 = vtanh.pop %v183
    %v328 = vtanh.pop %v252
    %v329 = vtanh.pop %v254
    %v330 = vtanh.pop %v323
    %v336 = vcombine.low %v326, %v327
    %v337 = vcombine.low %v328, %v329
    %v339 = vunpack.c.l.s4 1966171168
    %v340 = vunpack.c.0.s8 %v339
    %v341 = vlaneseq
    %v342 = vshrl.u32 %v341, 7
    %v343 = vsub.s32 %v340, %v342
    %v344 = vrot.slane %v336, %v343
    %v346 = vunpack.c.l.s4 1966171168
    %v347 = vunpack.c.0.s8 %v346
    %v348 = vlaneseq
    %v349 = vshrl.u32 %v348, 7
    %v350 = vsub.s32 %v347, %v349
    %v351 = vrot.slane %v337, %v350
    %v353 = vunpack.c.l.s4 1966171168
    %v354 = vunpack.c.0.s8 %v353
    %v355 = vlaneseq
    %v356 = vshrl.u32 %v355, 7
    %v357 = vsub.s32 %v354, %v356
    %v358 = vrot.slane %v330, %v357
    %v359 = vcombine.low %v344, %v351
    %v361 = vunpack.c.l.s4 1966171168
    %v362 = vunpack.c.0.s8 %v361
    %v363 = vlaneseq
    %v364 = vshrl.u32 %v363, 7
    %v365 = vsub.s32 %v362, %v364
    %v366 = vrot.slane %v359, %v365
    %v368 = vunpack.c.l.s4 1966171168
    %v369 = vunpack.c.0.s8 %v368
    %v370 = vlaneseq
    %v371 = vshrl.u32 %v370, 7
    %v372 = vsub.s32 %v369, %v371
    %v373 = vrot.slane %v358, %v372
    %v374 = vcombine.low %v366, %v373
    %v376 = vlaneseq
    %vm377 = vcmp.ge.s32.totalorder %v376, 0
    %vm378 = vcmp.lt.s32.totalorder %v376, 600
    %vm379 = vmand %vm377, %vm378
    %380 = vst.msk [vmem:[#allocation7] sm:$0x1f] %vm379, %v374
    // Predicated region
    $region18: #{tpu_custom_call.1} parent=1 // pred_check
      _
    $region19: #{tpu_custom_call.1} parent=1 // pred_check_branch
      %382 = sbr.rel (0) target = $region21
    $region20: #{tpu_custom_call.1} parent=1 // pred_region
      %s384 = ssub.s32 80, 80
      %385 = vsyncadd [#allocation4], %s384
      %s387 = sshll.u32 [#allocation7], 4
      %s388 = int_to_ptr.vmem [resolvable:$true] %s387
      %390 = dma.vmem_to_hbm [thread:$0]  %s388, 80, %s2, [#allocation4]
    $region21: #{tpu_custom_call.1} parent=1 // pred_fallthru
      _
    // Predicated region
    $region22: #{tpu_custom_call.1} parent=1 // pred_check
      _
    $region23: #{tpu_custom_call.1} parent=1 // pred_check_branch
      %392 = sbr.rel (0) target = $region25
    $region24: #{tpu_custom_call.1} parent=1 // pred_region
      %393 = dma.done [#allocation4], 80
    $region25: #{tpu_custom_call.1} parent=1 // pred_fallthru
      _
    %394 = vsyncpa [#allocation3], 1
    %395 = vsyncpa [#allocation6], 1
    %396 = vsyncpa [#allocation4], 1

</llo_original>
